<compile_context>
chip_gen: v5e
topology: v5e:2x2
jax: 0.10.0
libtpu: 0.0.40
codegen_flags: <defaults>
</compile_context>

<pallas_src>
import functools

import jax
import jax.numpy as jnp
from jax.experimental import pallas as pl
from jax.experimental.pallas import tpu as pltpu


# ----------------------------------------------------------------------------
# Tile pickers
# ----------------------------------------------------------------------------
def _pick_row_tile(m):
    for t in (256, 128, 64, 32, 16, 8):
        if m % t == 0:
            return t
    return m


def _pick_col_tile(n):
    for t in (512, 256, 128):
        if n % t == 0 and n // t >= 2:
            return t
    return n


# ----------------------------------------------------------------------------
# Fused  out = res + res_scale * act( LN(x) @ W + b )
# ----------------------------------------------------------------------------
def _fused_linear_kernel(act, has_ln, has_res, res_scale, *refs):
    refs = list(refs)
    x_ref = refs.pop(0)
    if has_ln:
        g_ref = refs.pop(0)
        bln_ref = refs.pop(0)
    if act == "glu":
        wv_ref = refs.pop(0)
        wg_ref = refs.pop(0)
        bv_ref = refs.pop(0)
        bg_ref = refs.pop(0)
    else:
        w_ref = refs.pop(0)
        b_ref = refs.pop(0)
    if has_res:
        res_ref = refs.pop(0)
    o_ref = refs.pop(0)

    x = x_ref[...].astype(jnp.float32)
    if has_ln:
        mean = jnp.mean(x, axis=-1, keepdims=True)
        var = jnp.mean(jnp.square(x - mean), axis=-1, keepdims=True)
        x = (x - mean) * jax.lax.rsqrt(var + 1e-5)
        x = x * g_ref[...].astype(jnp.float32) + bln_ref[...].astype(jnp.float32)

    xb = x.astype(jnp.bfloat16)  # MXU inputs in bf16, f32 accumulation
    if act == "glu":
        a = jnp.dot(xb, wv_ref[...], preferred_element_type=jnp.float32)
        a = a + bv_ref[...].astype(jnp.float32)
        g = jnp.dot(xb, wg_ref[...], preferred_element_type=jnp.float32)
        g = g + bg_ref[...].astype(jnp.float32)
        y = a * jax.nn.sigmoid(g)
    else:
        y = jnp.dot(xb, w_ref[...], preferred_element_type=jnp.float32)
        y = y + b_ref[...].astype(jnp.float32)
        if act == "swish":
            y = y * jax.nn.sigmoid(y)

    if has_res:
        y = res_ref[...].astype(jnp.float32) + res_scale * y
    o_ref[...] = y.astype(o_ref.dtype)


def fused_linear(x, w, b, *, act="none", ln_gb=None, res=None, res_scale=1.0):
    """x: (M, K) f32.  w: (K, N) bf16  (for act='glu': tuple (wv, wg), b=(bv, bg))."""
    M, K = x.shape
    if act == "glu":
        wv, wg = w
        bv, bg = b
        N = wv.shape[1]
    else:
        N = w.shape[1]
    TM = _pick_row_tile(M)
    TN = _pick_col_tile(N)
    grid = (M // TM, N // TN)

    in_specs = [pl.BlockSpec((TM, K), lambda i, j: (i, 0))]
    inputs = [x]
    if ln_gb is not None:
        g, bb = ln_gb
        in_specs += [pl.BlockSpec((1, K), lambda i, j: (0, 0)),
                     pl.BlockSpec((1, K), lambda i, j: (0, 0))]
        inputs += [g.reshape(1, K), bb.reshape(1, K)]
    if act == "glu":
        in_specs += [pl.BlockSpec((K, TN), lambda i, j: (0, j)),
                     pl.BlockSpec((K, TN), lambda i, j: (0, j)),
                     pl.BlockSpec((1, TN), lambda i, j: (0, j)),
                     pl.BlockSpec((1, TN), lambda i, j: (0, j))]
        inputs += [wv, wg, bv.reshape(1, N), bg.reshape(1, N)]
    else:
        in_specs += [pl.BlockSpec((K, TN), lambda i, j: (0, j)),
                     pl.BlockSpec((1, TN), lambda i, j: (0, j))]
        inputs += [w, b.reshape(1, N)]
    if res is not None:
        in_specs.append(pl.BlockSpec((TM, TN), lambda i, j: (i, j)))
        inputs.append(res)

    kernel = functools.partial(_fused_linear_kernel, act, ln_gb is not None,
                               res is not None, float(res_scale))
    return pl.pallas_call(
        kernel,
        grid=grid,
        in_specs=in_specs,
        out_specs=pl.BlockSpec((TM, TN), lambda i, j: (i, j)),
        out_shape=jax.ShapeDtypeStruct((M, N), jnp.float32),
        compiler_params=pltpu.CompilerParams(
            dimension_semantics=("parallel", "parallel")),
    )(*inputs)


# ----------------------------------------------------------------------------
# Standalone LayerNorm (end of each conformer layer + final encoder norm)
# ----------------------------------------------------------------------------
def _layernorm_kernel(x_ref, g_ref, b_ref, o_ref):
    x = x_ref[...].astype(jnp.float32)
    mean = jnp.mean(x, axis=-1, keepdims=True)
    var = jnp.mean(jnp.square(x - mean), axis=-1, keepdims=True)
    y = (x - mean) * jax.lax.rsqrt(var + 1e-5)
    o_ref[...] = (y * g_ref[...] + b_ref[...]).astype(o_ref.dtype)


def layernorm(x, g, b):
    M, D = x.shape
    TM = _pick_row_tile(M)
    return pl.pallas_call(
        _layernorm_kernel,
        grid=(M // TM,),
        in_specs=[pl.BlockSpec((TM, D), lambda i: (i, 0)),
                  pl.BlockSpec((1, D), lambda i: (0, 0)),
                  pl.BlockSpec((1, D), lambda i: (0, 0))],
        out_specs=pl.BlockSpec((TM, D), lambda i: (i, 0)),
        out_shape=jax.ShapeDtypeStruct((M, D), x.dtype),
        compiler_params=pltpu.CompilerParams(dimension_semantics=("parallel",)),
    )(x, g.reshape(1, D), b.reshape(1, D))


# ----------------------------------------------------------------------------
# Relative-position multi-head self-attention
# ----------------------------------------------------------------------------
def _attn_kernel(scale, H, dk, qu_ref, k_ref, v_ref, bd_ref, mask_ref, o_ref):
    """One batch element.  qu/k/v: (L, D) with heads in contiguous dk-column
    groups; bd: (H, L, L) pre-shifted positional scores; mask: (1, L) >0 = pad."""
    mask = mask_ref[...]
    neg = jnp.float32(-1e9)
    for h in range(H):                       # static, fully unrolled
        sl = slice(h * dk, (h + 1) * dk)
        qu = qu_ref[:, sl].astype(jnp.float32)
        k = k_ref[:, sl].astype(jnp.float32)
        v = v_ref[:, sl].astype(jnp.float32)
        ac = jnp.dot(qu, k.T, preferred_element_type=jnp.float32)      # content term
        s = (ac + bd_ref[h].astype(jnp.float32)) * scale
        s = jnp.where(mask > 0.0, neg, s)
        m = jnp.max(s, axis=-1, keepdims=True)
        p = jnp.exp(s - m)
        l = jnp.sum(p, axis=-1, keepdims=True)
        o = jnp.dot(p, v, preferred_element_type=jnp.float32) / l
        o_ref[:, sl] = o.astype(o_ref.dtype)


def rel_mhsa(qu, k, v, bd, key_mask, scale, H, dk):
    B, L, D = qu.shape
    spec_bld = pl.BlockSpec((None, L, D), lambda i: (i, 0, 0))
    return pl.pallas_call(
        functools.partial(_attn_kernel, float(scale), H, dk),
        grid=(B,),
        in_specs=[spec_bld, spec_bld, spec_bld,
                  pl.BlockSpec((None, H, L, L), lambda i: (i, 0, 0, 0)),
                  pl.BlockSpec((None, 1, L), lambda i: (i, 0, 0))],
        out_specs=spec_bld,
        out_shape=jax.ShapeDtypeStruct((B, L, D), jnp.float32),
        compiler_params=pltpu.CompilerParams(dimension_semantics=("parallel",)),
    )(qu, k, v, bd, key_mask)


def rel_shift(x):
    """Exact Transformer-XL / pynn rel_shift on (B, H, L, L)."""
    B, H, L, _ = x.shape
    zero_pad = jnp.zeros((B, H, L, 1), x.dtype)
    xp = jnp.concatenate([zero_pad, x], axis=-1)      # (B, H, L, L+1)
    xp = xp.reshape(B, H, L + 1, L)
    return xp[:, :, 1:, :].reshape(B, H, L, L)


# ----------------------------------------------------------------------------
# Depthwise conv1d + folded eval-mode BatchNorm + Swish
# ----------------------------------------------------------------------------
def _dwconv_kernel(K, L, xp_ref, w_ref, b_ref, s_ref, t_ref, o_ref):
    C = o_ref.shape[-1]
    acc = jnp.zeros((L, C), jnp.float32)
    for k in range(K):  # small static kernel width
        acc = acc + (xp_ref[pl.ds(k, L), :].astype(jnp.float32)
                     * w_ref[pl.ds(k, 1), :].astype(jnp.float32))
    acc = acc + b_ref[...]
    acc = acc * s_ref[...] + t_ref[...]      # BatchNorm (eval) folded to affine
    acc = acc * jax.nn.sigmoid(acc)          # Swish
    o_ref[...] = acc.astype(o_ref.dtype)


def depthwise_conv_bn_swish(x, w, b, bn_scale, bn_shift):
    # x: (B, L, C); w: (K, C)  (torch Conv1d(C, C, K, groups=C).weight[:, 0, :].T)
    B, L, C = x.shape
    K = w.shape[0]
    pad = (K - 1) // 2
    xp = jnp.pad(x, ((0, 0), (pad, K - 1 - pad), (0, 0)))
    Lp = L + K - 1
    # TODO(synk): for very long L, tile time into (256, C) blocks with a (K-1) halo.
    return pl.pallas_call(
        functools.partial(_dwconv_kernel, K, L),
        grid=(B,),
        in_specs=[
            pl.BlockSpec((None, Lp, C), lambda i: (i, 0, 0)),
            pl.BlockSpec((K, C), lambda i: (0, 0)),
            pl.BlockSpec((1, C), lambda i: (0, 0)),
            pl.BlockSpec((1, C), lambda i: (0, 0)),
            pl.BlockSpec((1, C), lambda i: (0, 0)),
        ],
        out_specs=pl.BlockSpec((None, L, C), lambda i: (i, 0, 0)),
        out_shape=jax.ShapeDtypeStruct((B, L, C), x.dtype),
        compiler_params=pltpu.CompilerParams(dimension_semantics=("parallel",)),
    )(xp, w, b.reshape(1, C), bn_scale.reshape(1, C), bn_shift.reshape(1, C))


# ----------------------------------------------------------------------------
# Model glue (reshapes / parameter plumbing in plain JAX)
# ----------------------------------------------------------------------------
def positional_embedding(L, d_model):
    # PositionalEmbedding.embed(mask): sinusoids over descending positions L-1..0
    pos = jnp.arange(L - 1, -1, -1, dtype=jnp.float32)
    inv_freq = 1.0 / (10000.0 ** (jnp.arange(0, d_model, 2, dtype=jnp.float32) / d_model))
    sinusoid = pos[:, None] * inv_freq[None, :]
    return jnp.concatenate([jnp.sin(sinusoid), jnp.cos(sinusoid)], axis=-1)  # (L, d_model)


def conformer_layer(x, p, pos_k, key_mask, B, L, H, dk, time_valid):
    M, D = x.shape
    scale = 1.0 / (dk ** 0.5)

    # --- Feed-forward module 1 (macaron, half-step residual) -----------------
    h = fused_linear(x, p["ff1_w1"], p["ff1_b1"], act="swish",
                     ln_gb=(p["ff1_ln_g"], p["ff1_ln_b"]))
    x = fused_linear(h, p["ff1_w2"], p["ff1_b2"], res=x, res_scale=0.5)

    # --- Multi-head self-attention with relative positional encoding ---------
    qkv = fused_linear(x, p["wqkv"], p["bqkv"],
                       ln_gb=(p["att_ln_g"], p["att_ln_b"]))          # (M, 3D)
    q = qkv[:, :D].reshape(B, L, H, dk)
    k = qkv[:, D:2 * D].reshape(B, L, D)
    v = qkv[:, 2 * D:].reshape(B, L, D)
    qu = (q + p["u"][None, None]).reshape(B, L, D)                    # content query
    qv = q + p["v"][None, None]                                       # positional query
    # positional scores as an MXU matmul + exact rel_shift (replaces the old
    # materialized (H, L, L, dk) tensor and its clipping approximation)
    bd = jnp.einsum("blhd,jhd->bhlj", qv, pos_k)
    bd = rel_shift(bd)                                                # (B, H, L, L)
    o = rel_mhsa(qu, k, v, bd, key_mask, scale, H, dk)                # (B, L, D)
    x = fused_linear(o.reshape(M, D), p["wo"], p["bo"], res=x)

    # --- Convolution module ---------------------------------------------------
    y = fused_linear(x, (p["cv_w1v"], p["cv_w1g"]), (p["cv_b1v"], p["cv_b1g"]),
                     act="glu", ln_gb=(p["cv_ln_g"], p["cv_ln_b"]))   # pointwise + GLU
    y = y.reshape(B, L, D)
    if time_valid is not None:
        # frames added by length padding behave like the original zero conv padding
        y = y * time_valid
    y = depthwise_conv_bn_swish(y, p["dw_w"], p["dw_b"], p["bn_scale"], p["bn_shift"])
    x = fused_linear(y.reshape(M, D), p["cv_w2"], p["cv_b2"], res=x)  # pointwise

    # --- Feed-forward module 2 + final layer norm -----------------------------
    h = fused_linear(x, p["ff2_w1"], p["ff2_b1"], act="swish",
                     ln_gb=(p["ff2_ln_g"], p["ff2_ln_b"]))
    x = fused_linear(h, p["ff2_w2"], p["ff2_b2"], res=x, res_scale=0.5)
    x = layernorm(x, p["out_ln_g"], p["out_ln_b"])
    return x


def encoder_forward(params, src_seq, src_mask, d_model, n_head):
    B, L0, d_input = src_seq.shape
    H = n_head
    dk = d_model // n_head
    orig_mask = src_mask

    # pad time ONCE so B*L is sublane aligned for every row-tiled kernel
    L = ((L0 + 7) // 8) * 8
    if L != L0:
        src_seq = jnp.pad(src_seq, ((0, 0), (0, L - L0), (0, 0)))
        src_mask = jnp.pad(src_mask, ((0, 0), (0, L - L0)))
        time_valid = (jnp.arange(L) < L0).astype(jnp.float32)[None, :, None]
    else:
        time_valid = None
    M = B * L

    x = fused_linear(src_seq.reshape(M, d_input), params["emb_w"], params["emb_b"])

    pos_emb = positional_embedding(L, d_model)                        # (L, d_model)
    key_mask = (src_mask == 0).astype(jnp.float32).reshape(B, 1, L)   # 1.0 = pad key

    for lp in params["layers"]:
        # dropout / layer_drop are training-only no-ops here (layer_drop=0.0)
        pos_k = jnp.dot(pos_emb, lp["wpos"]).reshape(L, H, dk)        # bias-free proj
        x = conformer_layer(x, lp, pos_k, key_mask, B, L, H, dk, time_valid)

    x = layernorm(x, params["norm_g"], params["norm_b"]).reshape(B, L, d_model)
    return x[:, :L0], orig_mask, None


# ----------------------------------------------------------------------------
# Deterministic parameter construction
# ----------------------------------------------------------------------------
def _xavier(key, shape):
    fan_in, fan_out = shape
    bound = (6.0 / (fan_in + fan_out)) ** 0.5
    return jax.random.uniform(key, shape, jnp.float32, -bound, bound)


def init_params(key, d_input, d_model, d_inner, n_layer, n_head, n_kernel):
    dk = d_model // n_head
    keys = iter(jax.random.split(key, 1024))
    nk = lambda: next(keys)

    def lin(fin, fout, dtype=jnp.bfloat16):
        return _xavier(nk(), (fin, fout)).astype(dtype), jnp.zeros((fout,), jnp.float32)

    p = {}
    p["emb_w"], p["emb_b"] = lin(d_input, d_model)
    layers = []
    for _ in range(n_layer):
        lp = {}
        lp["ff1_ln_g"] = jnp.ones((d_model,), jnp.float32)
        lp["ff1_ln_b"] = jnp.zeros((d_model,), jnp.float32)
        lp["ff1_w1"], lp["ff1_b1"] = lin(d_model, d_inner)
        lp["ff1_w2"], lp["ff1_b2"] = lin(d_inner, d_model)

        lp["att_ln_g"] = jnp.ones((d_model,), jnp.float32)
        lp["att_ln_b"] = jnp.zeros((d_model,), jnp.float32)
        wq, bq = lin(d_model, d_model)
        wk, bk = lin(d_model, d_model)
        wv, bv = lin(d_model, d_model)
        lp["wqkv"] = jnp.concatenate([wq, wk, wv], axis=1)            # fused projection
        lp["bqkv"] = jnp.concatenate([bq, bk, bv], axis=0)
        lp["wo"], lp["bo"] = lin(d_model, d_model)
        lp["wpos"] = _xavier(nk(), (d_model, d_model))                # f32, used in glue
        lp["u"] = 0.02 * jax.random.normal(nk(), (n_head, dk), jnp.float32)
        lp["v"] = 0.02 * jax.random.normal(nk(), (n_head, dk), jnp.float32)

        lp["cv_ln_g"] = jnp.ones((d_model,), jnp.float32)
        lp["cv_ln_b"] = jnp.zeros((d_model,), jnp.float32)
        w1, b1 = lin(d_model, 2 * d_model)
        lp["cv_w1v"], lp["cv_w1g"] = w1[:, :d_model], w1[:, d_model:]  # GLU value / gate
        lp["cv_b1v"], lp["cv_b1g"] = b1[:d_model], b1[d_model:]
        lp["dw_w"] = 0.1 * jax.random.normal(nk(), (n_kernel, d_model), jnp.float32)
        lp["dw_b"] = jnp.zeros((d_model,), jnp.float32)
        # eval-mode BatchNorm with default running stats (mean=0, var=1), eps=1e-5
        lp["bn_scale"] = jnp.ones((d_model,), jnp.float32) / jnp.sqrt(1.0 + 1e-5)
        lp["bn_shift"] = jnp.zeros((d_model,), jnp.float32)
        lp["cv_w2"], lp["cv_b2"] = lin(d_model, d_model)

        lp["ff2_ln_g"] = jnp.ones((d_model,), jnp.float32)
        lp["ff2_ln_b"] = jnp.zeros((d_model,), jnp.float32)
        lp["ff2_w1"], lp["ff2_b1"] = lin(d_model, d_inner)
        lp["ff2_w2"], lp["ff2_b2"] = lin(d_inner, d_model)

        lp["out_ln_g"] = jnp.ones((d_model,), jnp.float32)
        lp["out_ln_b"] = jnp.zeros((d_model,), jnp.float32)
        layers.append(lp)
    p["layers"] = layers
    p["norm_g"] = jnp.ones((d_model,), jnp.float32)
    p["norm_b"] = jnp.zeros((d_model,), jnp.float32)
    return p


# ----------------------------------------------------------------------------
if __name__ == "__main__":
    B, L = 2, 8
    d_input, d_model, d_inner = 16, 32, 64
    n_layer, n_head, n_kernel = 2, 4, 5

    key = jax.random.PRNGKey(0)
    kp, kx = jax.random.split(key)
    params = init_params(kp, d_input, d_model, d_inner, n_layer, n_head, n_kernel)

    src_seq = jax.random.normal(kx, (B, L, d_input), jnp.float32)
    lengths = jnp.array([8, 6], jnp.int32)
    src_mask = (jnp.arange(L)[None, :] < lengths[:, None]).astype(jnp.int32)

    enc_out, out_mask, hid = encoder_forward(params, src_seq, src_mask, d_model, n_head)
    jax.block_until_ready(enc_out)
    assert enc_out.shape == (B, L, d_model)
    assert bool(jnp.all(jnp.isfinite(enc_out)))
    print("KERNEL_OK")
</pallas_src>

<mosaic_0001>
module attributes {stable_mosaic.version = 11 : i64} {
  func.func @_fused_linear_kernel(%arg0: i32, %arg1: i32, %arg2: memref<16x16xf32, #tpu.memory_space<vmem>>, %arg3: memref<16x32xbf16, #tpu.memory_space<vmem>>, %arg4: memref<1x32xf32, #tpu.memory_space<vmem>>, %arg5: memref<16x32xf32, #tpu.memory_space<vmem>>) attributes {dimension_semantics = [#tpu.dimension_semantics<parallel>, #tpu.dimension_semantics<parallel>], iteration_bounds = array<i64: 1, 1>, scalar_prefetch = 0 : i64, scratch_operands = 0 : i64, tpu.core_type = #tpu.core_type<tc>, window_params = [{transform_indices = @transform_0, window_bounds = array<i64: 16, 16>}, {transform_indices = @transform_1, window_bounds = array<i64: 16, 32>}, {transform_indices = @transform_2, window_bounds = array<i64: 1, 32>}, {transform_indices = @transform_3, window_bounds = array<i64: 16, 32>}]} {
    %c0 = arith.constant 0 : index
    %c0_0 = arith.constant 0 : index
    %0 = vector.load %arg2[%c0, %c0_0] : memref<16x16xf32, #tpu.memory_space<vmem>>, vector<16x16xf32>
    %1 = arith.truncf %0 : vector<16x16xf32> to vector<16x16xbf16>
    %c0_1 = arith.constant 0 : index
    %c0_2 = arith.constant 0 : index
    %2 = vector.load %arg3[%c0_1, %c0_2] : memref<16x32xbf16, #tpu.memory_space<vmem>>, vector<16x32xbf16>
    %cst = arith.constant dense<0.000000e+00> : vector<16x32xf32>
    %3 = tpu.matmul %1, %2, %cst {dimension_numbers = #tpu.dot_dimension_numbers<[1], [0], [0], [1], [0, 0, 1, 1], [], []>} : vector<16x16xbf16>, vector<16x32xbf16>, vector<16x32xf32> -> vector<16x32xf32>
    %c0_3 = arith.constant 0 : index
    %c0_4 = arith.constant 0 : index
    %4 = vector.load %arg4[%c0_3, %c0_4] : memref<1x32xf32, #tpu.memory_space<vmem>>, vector<1x32xf32>
    %5 = vector.broadcast %4 : vector<1x32xf32> to vector<16x32xf32>
    %6 = arith.addf %3, %5 : vector<16x32xf32>
    %c0_5 = arith.constant 0 : index
    %c0_6 = arith.constant 0 : index
    %7 = vector.load %arg5[%c0_5, %c0_6] : memref<16x32xf32, #tpu.memory_space<vmem>>, vector<16x32xf32>
    tpu.vector_store %arg5[%c0_5, %c0_6], %6 {strides = array<i32>} : memref<16x32xf32, #tpu.memory_space<vmem>>, vector<16x32xf32>,
    return
  }
  func.func @transform_0(%arg0: i32, %arg1: i32) -> (i32, i32) {
    %c0_i32 = arith.constant 0 : i32
    %c0_i32_0 = arith.constant 0 : i32
    return %arg0, %c0_i32 : i32, i32
  }
  func.func @transform_1(%arg0: i32, %arg1: i32) -> (i32, i32) {
    %c0_i32 = arith.constant 0 : i32
    %c0_i32_0 = arith.constant 0 : i32
    return %c0_i32, %arg1 : i32, i32
  }
  func.func @transform_2(%arg0: i32, %arg1: i32) -> (i32, i32) {
    %c0_i32 = arith.constant 0 : i32
    %c0_i32_0 = arith.constant 0 : i32
    return %c0_i32, %arg1 : i32, i32
  }
  func.func @transform_3(%arg0: i32, %arg1: i32) -> (i32, i32) {
    %c0_i32 = arith.constant 0 : i32
    return %arg0, %arg1 : i32, i32
  }
}

</mosaic_0001>

<llo_original>
// kernel: tpu_custom_call.1
$region0: #{tpu_custom_call.1}
  #allocation0 [shape = 'u32[]', space=smem, size = 0x4, offset = 0x4, fixed_abs, tag = 'smem constant byte address 0x4 - core index']
  #allocation1 [shape = 'u32[72,128]{1,0:T(1,128)}', space=vmem, size = 0x9000, scoped, tag = 'internal scratch']
  %s0 = inlined_call_operand.hbm [shape: f32[16,16], index: 0, kind: input, shape index: {}]
  %s1 = inlined_call_operand.hbm [shape: bf16[16,32], index: 1, kind: input, shape index: {}]
  %s2 = inlined_call_operand.vmem [shape: f32[1,32], index: 2, kind: input, shape index: {}]
  %s3 = inlined_call_operand.hbm [shape: f32[16,32], index: 3, kind: output, shape index: {}]
  %s4 = sld [smem:[#allocation0]]
  $region30: #{tpu_custom_call.1} parent=0
    _
  %s6 = ssub.s32 1, %s4
  %s7 = scalar_select 0, %s6, %s4
  $region1: #{tpu_custom_call.1} parent=0
    #allocation2 [shape = 'u8[8192]{0}', space=vmem, size = 0x2000, scoped, tag = 'input window, operand 0, single buffered']
    #allocation3 [shape = 's32[1]{0}', space=sflag, size = 0x4, scoped, tag = 'scoped memory for tpu_custom_call.1']
    #allocation4 [shape = 's32[1]{0}', space=sflag, size = 0x4, scoped, tag = 'scoped memory for tpu_custom_call.1']
    #allocation5 [shape = 'u8[4096]{0}', space=vmem, size = 0x1000, scoped, tag = 'input window, operand 1, single buffered']
    #allocation6 [shape = 's32[1]{0}', space=sflag, size = 0x4, scoped, tag = 'scoped memory for tpu_custom_call.1']
    #allocation7 [shape = 'u8[8192]{0}', space=vmem, size = 0x2000, scoped, tag = 'output window, operand 0, single buffered']
    %8 = vsyncpa [#allocation3], 0
    %9 = vsyncpa [#allocation6], 0
    %10 = vsyncpa [#allocation4], 0
    // Predicated region
    $region2: #{tpu_custom_call.1} parent=1 // pred_check
      _
    $region3: #{tpu_custom_call.1} parent=1 // pred_check_branch
      %12 = sbr.rel (0) target = $region5
    $region4: #{tpu_custom_call.1} parent=1 // pred_region
      %14 = vsyncadd [#allocation3], 0
      %s15 = sshll.u32 %s0, 4
      %s16 = int_to_ptr.hbm [resolvable:$true] %s15
      %s17 = sshll.u32 [#allocation2], 4
      %s18 = int_to_ptr.vmem [resolvable:$true] %s17
      %23 = dma.hbm_to_vmem [thread:$0]  %s16, 256, %s18, [#allocation3], 128, 128, 8
    $region5: #{tpu_custom_call.1} parent=1 // pred_fallthru
      _
    // Predicated region
    $region6: #{tpu_custom_call.1} parent=1 // pred_check
      _
    $region7: #{tpu_custom_call.1} parent=1 // pred_check_branch
      %25 = sbr.rel (0) target = $region9
    $region8: #{tpu_custom_call.1} parent=1 // pred_region
      %27 = vsyncadd [#allocation6], 0
      %s28 = sshll.u32 %s1, 4
      %s29 = int_to_ptr.hbm [resolvable:$true] %s28
      %s30 = sshll.u32 [#allocation5], 4
      %s31 = int_to_ptr.vmem [resolvable:$true] %s30
      %36 = dma.hbm_to_vmem [thread:$0]  %s29, 128, %s31, [#allocation6], 64, 64, 4
    $region9: #{tpu_custom_call.1} parent=1 // pred_fallthru
      _
    // Predicated region
    $region10: #{tpu_custom_call.1} parent=1 // pred_check
      _
    $region11: #{tpu_custom_call.1} parent=1 // pred_check_branch
      %38 = sbr.rel (0) target = $region13
    $region12: #{tpu_custom_call.1} parent=1 // pred_region
      _
    $region13: #{tpu_custom_call.1} parent=1 // pred_fallthru
      _
    // Predicated region
    $region14: #{tpu_custom_call.1} parent=1 // pred_check
      _
    $region15: #{tpu_custom_call.1} parent=1 // pred_check_branch
      %40 = sbr.rel (0) target = $region17
    $region16: #{tpu_custom_call.1} parent=1 // pred_region
      %42 = dma.done [#allocation3], 256
    $region17: #{tpu_custom_call.1} parent=1 // pred_fallthru
      _
    // Predicated region
    $region18: #{tpu_custom_call.1} parent=1 // pred_check
      _
    $region19: #{tpu_custom_call.1} parent=1 // pred_check_branch
      %44 = sbr.rel (0) target = $region21
    $region20: #{tpu_custom_call.1} parent=1 // pred_region
      %46 = dma.done [#allocation6], 128
    $region21: #{tpu_custom_call.1} parent=1 // pred_fallthru
      _
    %v48 = vld [vmem:[#allocation2] sm:$0xff]
    %v49 = vld [vmem:[#allocation2 + $0x8] sm:$0xff]
    %v50 = vpack.c.bf16 %v49, %v48
    %v51 = vld [vmem:[#allocation5] sm:$0xf]
    %v52 = vld [vmem:[#allocation5 + $0x4] sm:$0xf]
    %v53 = vld [vmem:[%s2] sm:$0x1]
    %v55 = vperm.slane %v53, 0
    %v59 = vunpack.c.l.b16 %v51
    %v60 = vunpack.c.l.b16 %v52
    %v61 = vpack.c.b16 %v60, %v59
    %vm63 = vcmask 130048
    %v65 = vsel %vm63, %v50, 0
    %67 = vmatpush.bf16.msra.mxu0 0
    %68 = vmatpush.bf16.msra.mxu0 0
    %69 = vmatpush.bf16.msra.mxu0 0
    %70 = vmatpush.bf16.msra.mxu0 0
    %71 = vmatpush.bf16.msra.mxu0 0
    %72 = vmatpush.bf16.msra.mxu0 0
    %73 = vmatpush.bf16.msra.mxu0 0
    %74 = vmatpush.bf16.msra.mxu0 %v61
    %75 = vmatmul.bf16.gmra.mxu0 %v65
    %v76 = vpop.f32.mrf.mxu0
    %v77 = vadd.f32 %v55, %v76
    %v78 = vpop.f32.mrf.mxu0
    %v79 = vadd.f32 %v55, %v78
    %80 = vdwg.mxu0
    %vm81 = vcmask 261120
    %82 = vst.msk [vmem:[#allocation7] sm:$0xff] %vm81, %v77
    %83 = vst.msk [vmem:[#allocation7 + $0x8] sm:$0xff] %vm81, %v79
    // Predicated region
    $region22: #{tpu_custom_call.1} parent=1 // pred_check
      _
    $region23: #{tpu_custom_call.1} parent=1 // pred_check_branch
      %85 = sbr.rel (0) target = $region25
    $region24: #{tpu_custom_call.1} parent=1 // pred_region
      %87 = vsyncadd [#allocation4], 0
      %s88 = sshll.u32 [#allocation7], 4
      %s89 = int_to_ptr.vmem [resolvable:$true] %s88
      %s90 = sshll.u32 %s3, 4
      %s91 = int_to_ptr.hbm [resolvable:$true] %s90
      %96 = dma.vmem_to_hbm [thread:$0]  %s89, 256, %s91, [#allocation4], 128, 128, 8
    $region25: #{tpu_custom_call.1} parent=1 // pred_fallthru
      _
    // Predicated region
    $region26: #{tpu_custom_call.1} parent=1 // pred_check
      _
    $region27: #{tpu_custom_call.1} parent=1 // pred_check_branch
      %98 = sbr.rel (0) target = $region29
    $region28: #{tpu_custom_call.1} parent=1 // pred_region
      %100 = dma.done [#allocation4], 256
    $region29: #{tpu_custom_call.1} parent=1 // pred_fallthru
      _
    %101 = vsyncpa [#allocation3], 1
    %102 = vsyncpa [#allocation6], 1
    %103 = vsyncpa [#allocation4], 1

</llo_original>
